<compile_context>
chip_gen: v7x
topology: tpu7x:2x2x1
jax: 0.10.0
libtpu: 0.0.40
codegen_flags: <defaults>
</compile_context>

<pallas_src>
import functools

import jax
import jax.numpy as jnp
from jax import lax
from jax.experimental import pallas as pl
from jax.experimental.pallas import tpu as pltpu


def _round_up(x, m):
    return ((x + m - 1) // m) * m


@functools.lru_cache(maxsize=1)
def _vmem_budget():
    """Generation-aware (usable_budget, vmem_limit_bytes).

    v5e/v6e: 128 MiB physical VMEM -> ~96 MiB limit; v7x: 64 MiB -> ~48 MiB limit.
    Falls back to the conservative v7x numbers if the hardware query fails.
    """
    try:
        cap = getattr(pltpu.get_tpu_info(), "vmem_capacity_bytes", None)
    except Exception:
        cap = None
    if not cap:
        cap = 64 * 1024 * 1024
    limit = max(32 * 1024 * 1024, min(int(cap) * 3 // 4, 96 * 1024 * 1024))
    budget = limit * 7 // 8          # headroom for compiler-internal scratch
    return budget, limit


# ---------------------------------------------------------------------------
# Projection kernels.
# ---------------------------------------------------------------------------
def _proj_split_kernel(x_ref, w_ref, a_ref, b_ref):
    # Two independent dots: live f32 intermediate is tm x c_out, not tm x 2*c_out
    # (less spill traffic at identical MXU work).
    x = x_ref[...]
    co = a_ref.shape[-1]
    a_ref[...] = jnp.dot(x, w_ref[:, :co],
                         preferred_element_type=jnp.float32).astype(a_ref.dtype)
    b_ref[...] = jnp.dot(x, w_ref[:, co:],
                         preferred_element_type=jnp.float32).astype(b_ref.dtype)


def _proj_cat_kernel(x_ref, w_ref, o_ref):
    # Single lane-dense 2C-wide output (k|v slab for the query path).
    o_ref[...] = jnp.dot(x_ref[...], w_ref[...],
                         preferred_element_type=jnp.float32).astype(o_ref.dtype)


def _pick_tile_m(M, C, n_out, dsz, budget, tile_m):
    tm = max(8, min(tile_m, _round_up(M, 8)))

    def est(t):
        # double-buffered x tile + weight + output tile(s) + in-kernel f32 intermediate
        return (dsz * (2 * t * C + 2 * C * n_out + 2 * t * n_out)
                + 4 * t * n_out + (1 << 20))

    while tm > 8 and est(tm) > budget:
        tm = _round_up(tm // 2, 8)
    return tm


def projection_split(x2d, w_cat, c_out, *, tile_m=1024):
    """(x2d @ w_cat[:, :c_out], x2d @ w_cat[:, c_out:]) in one Pallas call."""
    M, C = x2d.shape
    assert w_cat.shape == (C, 2 * c_out)
    budget, limit = _vmem_budget()
    dsz = jnp.dtype(x2d.dtype).itemsize
    tm = _pick_tile_m(M, C, 2 * c_out, dsz, budget, tile_m)
    out_sd = jax.ShapeDtypeStruct((M, c_out), x2d.dtype)
    # TODO(synk): set pipeline_mode=pl.Buffered(1) on the weight BlockSpec once
    # single-buffered constant blocks are universally supported (reclaims VMEM).
    return pl.pallas_call(
        _proj_split_kernel,
        out_shape=(out_sd, out_sd),
        grid=(pl.cdiv(M, tm),),                      # partial last block masked by Pallas
        in_specs=[
            pl.BlockSpec((tm, C), lambda i: (i, 0)),
            pl.BlockSpec((C, 2 * c_out), lambda i: (0, 0)),
        ],
        out_specs=(
            pl.BlockSpec((tm, c_out), lambda i: (i, 0)),
            pl.BlockSpec((tm, c_out), lambda i: (i, 0)),
        ),
        compiler_params=pltpu.CompilerParams(
            dimension_semantics=("parallel",), vmem_limit_bytes=limit),
    )(x2d, w_cat)


def projection_cat(x2d, w_cat, *, tile_m=1024):
    """x2d (M, C) @ w_cat (C, N) -> (M, N), kept as one lane-dense slab."""
    M, C = x2d.shape
    N = w_cat.shape[1]
    budget, limit = _vmem_budget()
    dsz = jnp.dtype(x2d.dtype).itemsize
    tm = _pick_tile_m(M, C, N, dsz, budget, tile_m)
    return pl.pallas_call(
        _proj_cat_kernel,
        out_shape=jax.ShapeDtypeStruct((M, N), x2d.dtype),
        grid=(pl.cdiv(M, tm),),
        in_specs=[
            pl.BlockSpec((tm, C), lambda i: (i, 0)),
            pl.BlockSpec((C, N), lambda i: (0, 0)),
        ],
        out_specs=pl.BlockSpec((tm, N), lambda i: (i, 0)),
        compiler_params=pltpu.CompilerParams(
            dimension_semantics=("parallel",), vmem_limit_bytes=limit),
    )(x2d, w_cat)


# ---------------------------------------------------------------------------
# Cross-attention kernel, channel-last, heads split in-kernel.
#   q_ref  : (1, L, C)        support tokens, softmax scale pre-folded into Wq
#   kv_ref : (1, TQ, hw, 2C)  k = [..., :C], v = [..., C:]
#   o_ref  : (1, TQ, L, C)    written with ONE lane-dense store per grid step
# ---------------------------------------------------------------------------
def _attn_kernel(q_ref, kv_ref, o_ref, *, num_heads, c):
    tq, hw = kv_ref.shape[1], kv_ref.shape[2]
    L = q_ref.shape[1]
    cs = c // num_heads

    q = q_ref[0]                               # (L, C)
    kv = kv_ref[0]                             # (tq, hw, 2C)
    kv_flat = kv.reshape(tq * hw, 2 * c)       # lane dim untouched -> cheap

    outs = []
    for hd in range(num_heads):                # static unroll, static channel offsets
        lo = hd * cs
        qh = q[:, lo:lo + cs]                  # (L, cs)
        kh = kv_flat[:, lo:lo + cs]            # (tq*hw, cs)
        vh = kv[:, :, c + lo:c + lo + cs]      # (tq, hw, cs)

        # Scores for all tq windows at once: one (tq*hw, cs) x (cs, L) matmul.
        # N = L is large and lane-dense (good 256-wide-MXU fill), no q broadcast.
        s = lax.dot_general(kh, qh, (((1,), (1,)), ((), ())),
                            preferred_element_type=jnp.float32)     # (tq*hw, L)
        s = s.reshape(tq, hw, L)               # split leading dim only (cheap)

        # per-window softmax over the hw keys
        m = jnp.max(s, axis=1, keepdims=True)
        p = jnp.exp(s - m)
        denom = jnp.sum(p, axis=1, keepdims=True)
        # EUP approximate reciprocal (~1e-4 rel err); swap for p / denom if exact
        # numerics are required downstream.
        p = p * pl.reciprocal(denom, approx=True)

        # o[t, l, d] = sum_w p[t, w, l] * v[t, w, d]   -> (tq, L, cs)
        o_h = lax.dot_general(p.astype(vh.dtype), vh,
                              (((1,), (1,)), ((0,), (0,))),
                              preferred_element_type=jnp.float32)
        outs.append(o_h.astype(o_ref.dtype))

    # Single full-width lane-dense store; head-major channel order matches PyTorch.
    o_ref[0] = jnp.concatenate(outs, axis=-1)


def attention(q_sup, kv_qry, *, num_heads):
    """q_sup: (b, L, C); kv_qry: (b, NQ, hw, 2C) -> (b, NQ, L, C)."""
    b, L, C = q_sup.shape
    _, NQ, hw, C2 = kv_qry.shape
    assert C2 == 2 * C
    budget, limit = _vmem_budget()
    dsz = jnp.dtype(q_sup.dtype).itemsize

    def est(t):
        blocks = dsz * (2 * L * C + 2 * t * hw * 2 * C + 2 * t * L * C)
        tmps = 4 * 2 * t * hw * L                 # f32 scores + exp(p)
        tmps += 2 * dsz * t * L * C               # per-head outputs + concat result
        tmps += 4 * t * L * (C // num_heads)      # f32 dot result of current head
        return blocks + tmps + (1 << 20)

    # Largest tq that fits VMEM; no NQ-divisibility requirement (pl.cdiv grid).
    cap = NQ if b >= 2 else max(1, pl.cdiv(NQ, 2))   # keep >=2 NQ steps when b == 1
    cap = min(cap, max(1, 2048 // hw))               # keep per-step temporaries sane
    tq = 1
    for t in range(cap, 0, -1):
        if est(t) <= budget:
            tq = t
            break

    kern = functools.partial(_attn_kernel, num_heads=num_heads, c=C)
    return pl.pallas_call(
        kern,
        out_shape=jax.ShapeDtypeStruct((b, NQ, L, C), q_sup.dtype),
        grid=(b, pl.cdiv(NQ, tq)),
        in_specs=[
            pl.BlockSpec((1, L, C), lambda bi, qi: (bi, 0, 0)),
            pl.BlockSpec((1, tq, hw, 2 * C), lambda bi, qi: (bi, qi, 0, 0)),
        ],
        out_specs=pl.BlockSpec((1, tq, L, C), lambda bi, qi: (bi, qi, 0, 0)),
        compiler_params=pltpu.CompilerParams(
            dimension_semantics=("parallel", "parallel"),
            vmem_limit_bytes=limit),
    )(q_sup, kv_qry)


# ---------------------------------------------------------------------------
# TokenQKV_Local forward (glue = pure reshapes; all matmuls / softmax in Pallas)
# ---------------------------------------------------------------------------
def prepare_params(params, num_heads, qk_scale=None):
    """Pre-concatenate / scale-fold the projection weights once, outside the hot path."""
    wq, wk, wv = params["wq"], params["wk"], params["wv"]     # PyTorch (out, in) layout
    c = wq.shape[0]
    scale = qk_scale if qk_scale is not None else (c // num_heads) ** (-0.5)
    return {
        "w_sup": jnp.concatenate([wq.T * scale, wv.T], axis=1),   # [q*scale | v]
        "w_qry": jnp.concatenate([wk.T, wv.T], axis=1),           # [k | v]
    }


def token_qkv_local(x_query, x_support, params, num_heads, qk_scale=None,
                    materialize_o_support=True):
    b, n, kshot, hw, c = x_support.shape
    q = x_query.shape[2]

    if "w_sup" in params and "w_qry" in params:
        w_sup, w_qry = params["w_sup"], params["w_qry"]
    else:
        pp = prepare_params(params, num_heads, qk_scale)
        w_sup, w_qry = pp["w_sup"], pp["w_qry"]

    xs_flat = x_support.reshape(b * n * kshot * hw, c)
    xq_flat = x_query.reshape(b * n * q * hw, c)

    # Support side: two distinct consumers -> two lane-dense outputs, two in-kernel dots.
    q_support, o_support = projection_split(xs_flat, w_sup, c)
    # Query side: k and v feed the same kernel -> keep them as one (M, 2C) slab.
    kv_query = projection_cat(xq_flat, w_qry)

    L = n * kshot * hw
    NQ = n * q

    # channel-last layouts feeding the attention kernel: pure reshapes, no transposes.
    q_sup = q_support.reshape(b, L, c)
    kv_q = kv_query.reshape(b, NQ, hw, 2 * c)

    out = attention(q_sup, kv_q, num_heads=num_heads)        # (b, NQ, L, C)
    o_query = out.reshape(b, NQ, n * kshot, hw, c)           # free reshape

    o_support = o_support.reshape(b, 1, n * kshot, hw, c)
    if materialize_o_support:
        # PyTorch .expand() is a zero-copy view; XLA materializes this broadcast.
        # Consumers that accept the compact (b, 1, ...) form should pass
        # materialize_o_support=False to avoid writing NQ identical copies to HBM.
        o_support = jnp.broadcast_to(o_support, (b, NQ, n * kshot, hw, c))
    return o_query, o_support


# ---------------------------------------------------------------------------
# Pure-JAX reference (mirrors the PyTorch forward exactly), for verification
# ---------------------------------------------------------------------------
def token_qkv_local_ref(x_query, x_support, params, num_heads, qk_scale=None):
    b, n, kshot, hw, c = x_support.shape
    q = x_query.shape[2]
    h = num_heads
    cs = c // h
    scale = qk_scale if qk_scale is not None else cs ** (-0.5)
    wq, wk, wv = params["wq"], params["wk"], params["wv"]

    xs = x_support.reshape(b, n, kshot * hw, c)
    q_support = xs @ wq.T
    k_query = x_query @ wk.T
    v_query = x_query @ wv.T
    o_support = xs @ wv.T

    q_support = (q_support.reshape(b, n, 1, kshot * hw, h, cs)
                 .transpose(0, 2, 4, 1, 3, 5)
                 .reshape(b, 1, h, n * kshot * hw, cs))
    k_query = (k_query.reshape(b, n, q, hw, h, cs)
               .transpose(0, 1, 2, 4, 3, 5).reshape(b, n * q, h, hw, cs))
    v_query = (v_query.reshape(b, n, q, hw, h, cs)
               .transpose(0, 1, 2, 4, 3, 5).reshape(b, n * q, h, hw, cs))

    attn = jnp.einsum("bhld,bqhwd->bqhlw", q_support[:, 0], k_query) * scale
    attn = jax.nn.softmax(attn, axis=-1)
    o_query = jnp.einsum("bqhlw,bqhwd->bqhld", attn, v_query)
    o_query = (o_query.transpose(0, 1, 3, 2, 4)
               .reshape(b, n * q, n * kshot, hw, c))
    o_support = jnp.broadcast_to(
        o_support.reshape(b, 1, n * kshot, hw, c), (b, n * q, n * kshot, hw, c))
    return o_query, o_support


# ---------------------------------------------------------------------------
if __name__ == "__main__":
    b, n, kshot, q, hw = 2, 2, 2, 2, 16
    c, num_heads = 32, 4

    key = jax.random.PRNGKey(0)
    k1, k2, k3, k4, k5 = jax.random.split(key, 5)
    x_query = jax.random.normal(k1, (b, n, q, hw, c), jnp.float32)
    x_support = jax.random.normal(k2, (b, n, kshot, hw, c), jnp.float32)

    # trunc_normal_(std=0.02) init for q/k/v Linear weights, qkv_bias=False
    params = {
        "wq": 0.02 * jax.random.truncated_normal(k3, -2.0, 2.0, (c, c), jnp.float32),
        "wk": 0.02 * jax.random.truncated_normal(k4, -2.0, 2.0, (c, c), jnp.float32),
        "wv": 0.02 * jax.random.truncated_normal(k5, -2.0, 2.0, (c, c), jnp.float32),
    }

    o_query, o_support = token_qkv_local(x_query, x_support, params, num_heads)
    jax.block_until_ready((o_query, o_support))

    o_query_ref, o_support_ref = token_qkv_local_ref(x_query, x_support, params, num_heads)
    assert o_query.shape == (b, n * q, n * kshot, hw, c)
    assert o_support.shape == (b, n * q, n * kshot, hw, c)
    assert jnp.allclose(o_query, o_query_ref, atol=2e-3, rtol=2e-3)
    assert jnp.allclose(o_support, o_support_ref, atol=2e-3, rtol=2e-3)

    print("KERNEL_OK")
</pallas_src>

<mosaic_0001>
module attributes {stable_mosaic.version = 11 : i64} {
  func.func @_proj_split_kernel(%arg0: i32, %arg1: memref<128x32xf32, #tpu.memory_space<vmem>>, %arg2: memref<32x64xf32, #tpu.memory_space<vmem>>, %arg3: memref<128x32xf32, #tpu.memory_space<vmem>>, %arg4: memref<128x32xf32, #tpu.memory_space<vmem>>) attributes {dimension_semantics = [#tpu.dimension_semantics<parallel>], iteration_bounds = array<i64: 1>, scalar_prefetch = 0 : i64, scratch_operands = 0 : i64, tpu.core_type = #tpu.core_type<tc>, window_params = [{transform_indices = @transform_0, window_bounds = array<i64: 128, 32>}, {pipeline_mode = #tpu.pipeline_mode<synchronous>, transform_indices = @transform_1, window_bounds = array<i64: 32, 64>}, {transform_indices = @transform_2, window_bounds = array<i64: 128, 32>}, {transform_indices = @transform_3, window_bounds = array<i64: 128, 32>}]} {
    %c0 = arith.constant 0 : index
    %c0_0 = arith.constant 0 : index
    %0 = vector.load %arg1[%c0, %c0_0] : memref<128x32xf32, #tpu.memory_space<vmem>>, vector<128x32xf32>
    %c0_1 = arith.constant 0 : index
    %c0_2 = arith.constant 0 : index
    %1 = vector.load %arg2[%c0_1, %c0_2] : memref<32x64xf32, #tpu.memory_space<vmem>>, vector<32x32xf32>
    %cst = arith.constant dense<0.000000e+00> : vector<128x32xf32>
    %2 = tpu.matmul %0, %1, %cst {dimension_numbers = #tpu.dot_dimension_numbers<[1], [0], [0], [1], [0, 0, 1, 1], [], []>} : vector<128x32xf32>, vector<32x32xf32>, vector<128x32xf32> -> vector<128x32xf32>
    %c0_3 = arith.constant 0 : index
    %c0_4 = arith.constant 0 : index
    %3 = vector.load %arg3[%c0_3, %c0_4] : memref<128x32xf32, #tpu.memory_space<vmem>>, vector<128x32xf32>
    tpu.vector_store %arg3[%c0_3, %c0_4], %2 {strides = array<i32>} : memref<128x32xf32, #tpu.memory_space<vmem>>, vector<128x32xf32>,
    %c0_5 = arith.constant 0 : index
    %c32 = arith.constant 32 : index
    %4 = vector.load %arg2[%c0_5, %c32] : memref<32x64xf32, #tpu.memory_space<vmem>>, vector<32x32xf32>
    %cst_6 = arith.constant dense<0.000000e+00> : vector<128x32xf32>
    %5 = tpu.matmul %0, %4, %cst_6 {dimension_numbers = #tpu.dot_dimension_numbers<[1], [0], [0], [1], [0, 0, 1, 1], [], []>} : vector<128x32xf32>, vector<32x32xf32>, vector<128x32xf32> -> vector<128x32xf32>
    %c0_7 = arith.constant 0 : index
    %c0_8 = arith.constant 0 : index
    %6 = vector.load %arg4[%c0_7, %c0_8] : memref<128x32xf32, #tpu.memory_space<vmem>>, vector<128x32xf32>
    tpu.vector_store %arg4[%c0_7, %c0_8], %5 {strides = array<i32>} : memref<128x32xf32, #tpu.memory_space<vmem>>, vector<128x32xf32>,
    return
  }
  func.func @transform_0(%arg0: i32) -> (i32, i32) {
    %c0_i32 = arith.constant 0 : i32
    %c0_i32_0 = arith.constant 0 : i32
    return %arg0, %c0_i32 : i32, i32
  }
  func.func @transform_1(%arg0: i32) -> (i32, i32) {
    %c0_i32 = arith.constant 0 : i32
    %c0_i32_0 = arith.constant 0 : i32
    %c0_i32_1 = arith.constant 0 : i32
    return %c0_i32, %c0_i32_0 : i32, i32
  }
  func.func @transform_2(%arg0: i32) -> (i32, i32) {
    %c0_i32 = arith.constant 0 : i32
    %c0_i32_0 = arith.constant 0 : i32
    return %arg0, %c0_i32 : i32, i32
  }
  func.func @transform_3(%arg0: i32) -> (i32, i32) {
    %c0_i32 = arith.constant 0 : i32
    %c0_i32_0 = arith.constant 0 : i32
    return %arg0, %c0_i32 : i32, i32
  }
}

</mosaic_0001>

<llo_original>
// kernel: tpu_custom_call.1
$region0: #{tpu_custom_call.1}
  #allocation0 [shape = 'u32[]', space=smem, size = 0x4, offset = 0x4, fixed_abs, tag = 'smem constant byte address 0x4 - core index']
  #allocation1 [shape = 'u32[144,128]{1,0:T(1,128)}', space=vmem, size = 0x12000, scoped, tag = 'internal scratch']
  %s0 = inlined_call_operand.vmem [shape: f32[128,32], index: 0, kind: input, shape index: {}]
  %s1 = inlined_call_operand.vmem [shape: f32[32,64], index: 1, kind: input, shape index: {}]
  %s2 = inlined_call_operand.vmem [shape: f32[128,32], index: 2, kind: output, shape index: {0}]
  %s3 = inlined_call_operand.vmem [shape: f32[128,32], index: 3, kind: output, shape index: {1}]
  %4 = xla_tuple %s2, %s3
  %s5 = sld [smem:[#allocation0]]
  $region26: #{tpu_custom_call.1} parent=0
    _
  %s7 = ssub.s32 1, %s5
  %s8 = scalar_select 0, %s7, %s5
  // Predicated region
  $region2: #{tpu_custom_call.1} parent=0 // pred_check
    _
  $region3: #{tpu_custom_call.1} parent=0 // pred_check_branch
    %10 = sbr.rel (0) target = $region5
  $region4: #{tpu_custom_call.1} parent=0 // pred_region
    _
  $region5: #{tpu_custom_call.1} parent=0 // pred_fallthru
    _
  // Predicated region
  $region6: #{tpu_custom_call.1} parent=0 // pred_check
    _
  $region7: #{tpu_custom_call.1} parent=0 // pred_check_branch
    %12 = sbr.rel (0) target = $region9
  $region8: #{tpu_custom_call.1} parent=0 // pred_region
    _
  $region9: #{tpu_custom_call.1} parent=0 // pred_fallthru
    _
  %v13 = vld [vmem:[%s0] sm:$0xff]
  %v14 = vld [vmem:[%s0 + $0x8] sm:$0xff]
  %v15 = vld [vmem:[%s0 + $0x10] sm:$0xff]
  %v16 = vld [vmem:[%s0 + $0x18] sm:$0xff]
  %v17 = vld [vmem:[%s0 + $0x20] sm:$0xff]
  %v18 = vld [vmem:[%s0 + $0x28] sm:$0xff]
  %v19 = vld [vmem:[%s0 + $0x30] sm:$0xff]
  %v20 = vld [vmem:[%s0 + $0x38] sm:$0xff]
  %v21 = vld [vmem:[%s0 + $0x40] sm:$0xff]
  %v22 = vld [vmem:[%s0 + $0x48] sm:$0xff]
  %v23 = vld [vmem:[%s0 + $0x50] sm:$0xff]
  %v24 = vld [vmem:[%s0 + $0x58] sm:$0xff]
  %v25 = vld [vmem:[%s0 + $0x60] sm:$0xff]
  %v26 = vld [vmem:[%s0 + $0x68] sm:$0xff]
  %v27 = vld [vmem:[%s0 + $0x70] sm:$0xff]
  %v28 = vld [vmem:[%s0 + $0x78] sm:$0xff]
  %v29 = vld [vmem:[%s1] sm:$0xff]
  %v30 = vld [vmem:[%s1 + $0x8] sm:$0xff]
  %v31 = vld [vmem:[%s1 + $0x10] sm:$0xff]
  %v32 = vld [vmem:[%s1 + $0x18] sm:$0xff]
  %vm33 = vcmask 261120
  %v35 = vsel %vm33, %v13, 0
  %v38 = vsel %vm33, %v14, 0
  %v41 = vsel %vm33, %v15, 0
  %v44 = vsel %vm33, %v16, 0
  %v47 = vsel %vm33, %v17, 0
  %v50 = vsel %vm33, %v18, 0
  %v53 = vsel %vm33, %v19, 0
  %v56 = vsel %vm33, %v20, 0
  %v59 = vsel %vm33, %v21, 0
  %v62 = vsel %vm33, %v22, 0
  %v65 = vsel %vm33, %v23, 0
  %v68 = vsel %vm33, %v24, 0
  %v71 = vsel %vm33, %v25, 0
  %v74 = vsel %vm33, %v26, 0
  %v77 = vsel %vm33, %v27, 0
  %v80 = vsel %vm33, %v28, 0
  %82 = vmatprep.subr.mxu0 0.0
  %83 = vmatpush1.msra.mxu0 %v29
  %84 = vmatprep.subr.mxu0 0.0
  %85 = vmatpush1.msra.mxu0 %v30
  %86 = vmatprep.subr.mxu0 0.0
  %87 = vmatpush1.msra.mxu0 %v31
  %88 = vmatprep.subr.mxu0 0.0
  %89 = vmatpush1.msra.mxu0 %v32
  %90 = vmatprep.subr.mxu0 0.0
  %91 = vmatpush1.msra.mxu0 0.0
  %92 = vmatprep.subr.mxu0 0.0
  %93 = vmatpush1.msra.mxu0 0.0
  %94 = vmatprep.subr.mxu0 0.0
  %95 = vmatpush1.msra.mxu0 0.0
  %96 = vmatprep.subr.mxu0 0.0
  %97 = vmatpush1.msra.mxu0 0.0
  %98 = vmatprep.subr.mxu0 0.0
  %99 = vmatpush1.msra.mxu0 0.0
  %100 = vmatprep.subr.mxu0 0.0
  %101 = vmatpush1.msra.mxu0 0.0
  %102 = vmatprep.subr.mxu0 0.0
  %103 = vmatpush1.msra.mxu0 0.0
  %104 = vmatprep.subr.mxu0 0.0
  %105 = vmatpush1.msra.mxu0 0.0
  %106 = vmatprep.subr.mxu0 0.0
  %107 = vmatpush1.msra.mxu0 0.0
  %108 = vmatprep.subr.mxu0 0.0
  %109 = vmatpush1.msra.mxu0 0.0
  %110 = vmatprep.subr.mxu0 0.0
  %111 = vmatpush1.msra.mxu0 0.0
  %112 = vmatprep.subr.mxu0 0.0
  %113 = vmatpush1.msra.mxu0 0.0
  %114 = vmatprep.subr.mxu0 0.0
  %115 = vmatpush1.msra.mxu0 0.0
  %116 = vmatprep.subr.mxu0 0.0
  %117 = vmatpush1.msra.mxu0 0.0
  %118 = vmatprep.subr.mxu0 0.0
  %119 = vmatpush1.msra.mxu0 0.0
  %120 = vmatprep.subr.mxu0 0.0
  %121 = vmatpush1.msra.mxu0 0.0
  %122 = vmatprep.subr.mxu0 0.0
  %123 = vmatpush1.msra.mxu0 0.0
  %124 = vmatprep.subr.mxu0 0.0
  %125 = vmatpush1.msra.mxu0 0.0
  %126 = vmatprep.subr.mxu0 0.0
  %127 = vmatpush1.msra.mxu0 0.0
  %128 = vmatprep.subr.mxu0 0.0
  %129 = vmatpush1.msra.mxu0 0.0
  %130 = vmatprep.subr.mxu0 0.0
  %131 = vmatpush1.msra.mxu0 0.0
  %132 = vmatprep.subr.mxu0 0.0
  %133 = vmatpush1.msra.mxu0 0.0
  %134 = vmatprep.subr.mxu0 0.0
  %135 = vmatpush1.msra.mxu0 0.0
  %136 = vmatprep.subr.mxu0 0.0
  %137 = vmatpush1.msra.mxu0 0.0
  %138 = vmatprep.subr.mxu0 0.0
  %139 = vmatpush1.msra.mxu0 0.0
  %140 = vmatprep.subr.mxu0 0.0
  %141 = vmatpush1.msra.mxu0 0.0
  %142 = vmatprep.subr.mxu0 0.0
  %143 = vmatpush1.msra.mxu0 0.0
  %144 = vmatprep.subr.mxu0 0.0
  %145 = vmatpush1.msra.mxu0 0.0
  %146 = vmatprep.mubr.f32.mxu0 0.0
  %147 = vmatmul.mubr.f32.gmra.mrb[0].mxu0 %v35
  %v148 = vpop.f32.mrb[0].mxu0
  %v149 = vadd.f32 0.0, %v148
  %v150 = vpop.f32.mrb[0].mxu0
  %151 = vmatprep.mubr.f32.mxu0 0.0
  %152 = vmatmul.mubr.f32.gmra.mrb[0].mxu0 %v38
  %v153 = vpop.f32.mrb[0].mxu0
  %v154 = vadd.f32 0.0, %v153
  %v155 = vpop.f32.mrb[0].mxu0
  %156 = vmatprep.mubr.f32.mxu0 0.0
  %157 = vmatmul.mubr.f32.gmra.mrb[0].mxu0 %v41
  %v158 = vpop.f32.mrb[0].mxu0
  %v159 = vadd.f32 0.0, %v158
  %v160 = vpop.f32.mrb[0].mxu0
  %161 = vmatprep.mubr.f32.mxu0 0.0
  %162 = vmatmul.mubr.f32.gmra.mrb[0].mxu0 %v44
  %v163 = vpop.f32.mrb[0].mxu0
  %v164 = vadd.f32 0.0, %v163
  %v165 = vpop.f32.mrb[0].mxu0
  %166 = vmatprep.mubr.f32.mxu0 0.0
  %167 = vmatmul.mubr.f32.gmra.mrb[0].mxu0 %v47
  %v168 = vpop.f32.mrb[0].mxu0
  %v169 = vadd.f32 0.0, %v168
  %v170 = vpop.f32.mrb[0].mxu0
  %171 = vmatprep.mubr.f32.mxu0 0.0
  %172 = vmatmul.mubr.f32.gmra.mrb[0].mxu0 %v50
  %v173 = vpop.f32.mrb[0].mxu0
  %v174 = vadd.f32 0.0, %v173
  %v175 = vpop.f32.mrb[0].mxu0
  %176 = vmatprep.mubr.f32.mxu0 0.0
  %177 = vmatmul.mubr.f32.gmra.mrb[0].mxu0 %v53
  %v178 = vpop.f32.mrb[0].mxu0
  %v179 = vadd.f32 0.0, %v178
  %v180 = vpop.f32.mrb[0].mxu0
  %181 = vmatprep.mubr.f32.mxu0 0.0
  %182 = vmatmul.mubr.f32.gmra.mrb[0].mxu0 %v56
  %v183 = vpop.f32.mrb[0].mxu0
  %v184 = vadd.f32 0.0, %v183
  %v185 = vpop.f32.mrb[0].mxu0
  %186 = vmatprep.mubr.f32.mxu0 0.0
  %187 = vmatmul.mubr.f32.gmra.mrb[0].mxu0 %v59
  %v188 = vpop.f32.mrb[0].mxu0
  %v189 = vadd.f32 0.0, %v188
  %v190 = vpop.f32.mrb[0].mxu0
  %191 = vmatprep.mubr.f32.mxu0 0.0
  %192 = vmatmul.mubr.f32.gmra.mrb[0].mxu0 %v62
  %v193 = vpop.f32.mrb[0].mxu0
  %v194 = vadd.f32 0.0, %v193
  %v195 = vpop.f32.mrb[0].mxu0
  %196 = vmatprep.mubr.f32.mxu0 0.0
  %197 = vmatmul.mubr.f32.gmra.mrb[0].mxu0 %v65
  %v198 = vpop.f32.mrb[0].mxu0
  %v199 = vadd.f32 0.0, %v198
  %v200 = vpop.f32.mrb[0].mxu0
  %201 = vmatprep.mubr.f32.mxu0 0.0
  %202 = vmatmul.mubr.f32.gmra.mrb[0].mxu0 %v68
  %v203 = vpop.f32.mrb[0].mxu0
  %v204 = vadd.f32 0.0, %v203
  %v205 = vpop.f32.mrb[0].mxu0
  %206 = vmatprep.mubr.f32.mxu0 0.0
  %207 = vmatmul.mubr.f32.gmra.mrb[0].mxu0 %v71
  %v208 = vpop.f32.mrb[0].mxu0
  %v209 = vadd.f32 0.0, %v208
  %v210 = vpop.f32.mrb[0].mxu0
  %211 = vmatprep.mubr.f32.mxu0 0.0
  %212 = vmatmul.mubr.f32.gmra.mrb[0].mxu0 %v74
  %v213 = vpop.f32.mrb[0].mxu0
  %v214 = vadd.f32 0.0, %v213
  %v215 = vpop.f32.mrb[0].mxu0
  %216 = vmatprep.mubr.f32.mxu0 0.0
  %217 = vmatmul.mubr.f32.gmra.mrb[0].mxu0 %v77
  %v218 = vpop.f32.mrb[0].mxu0
  %v219 = vadd.f32 0.0, %v218
  %v220 = vpop.f32.mrb[0].mxu0
  %221 = vmatprep.mubr.f32.mxu0 0.0
  %222 = vmatmul.mubr.f32.gmra.mrb[0].mxu0 %v80
  %v223 = vpop.f32.mrb[0].mxu0
  %v224 = vadd.f32 0.0, %v223
  %v225 = vpop.f32.mrb[0].mxu0
  %226 = vdwg.mxu0
  %227 = vst.msk [vmem:[%s2] sm:$0xff] %vm33, %v149
  %228 = vst.msk [vmem:[%s2 + $0x8] sm:$0xff] %vm33, %v154
  %229 = vst.msk [vmem:[%s2 + $0x10] sm:$0xff] %vm33, %v159
  %230 = vst.msk [vmem:[%s2 + $0x18] sm:$0xff] %vm33, %v164
  %231 = vst.msk [vmem:[%s2 + $0x20] sm:$0xff] %vm33, %v169
  %232 = vst.msk [vmem:[%s2 + $0x28] sm:$0xff] %vm33, %v174
  %233 = vst.msk [vmem:[%s2 + $0x30] sm:$0xff] %vm33, %v179
  %234 = vst.msk [vmem:[%s2 + $0x38] sm:$0xff] %vm33, %v184
  %235 = vst.msk [vmem:[%s2 + $0x40] sm:$0xff] %vm33, %v189
  %236 = vst.msk [vmem:[%s2 + $0x48] sm:$0xff] %vm33, %v194
  %237 = vst.msk [vmem:[%s2 + $0x50] sm:$0xff] %vm33, %v199
  %238 = vst.msk [vmem:[%s2 + $0x58] sm:$0xff] %vm33, %v204
  %239 = vst.msk [vmem:[%s2 + $0x60] sm:$0xff] %vm33, %v209
  %240 = vst.msk [vmem:[%s2 + $0x68] sm:$0xff] %vm33, %v214
  %241 = vst.msk [vmem:[%s2 + $0x70] sm:$0xff] %vm33, %v219
  %242 = vst.msk [vmem:[%s2 + $0x78] sm:$0xff] %vm33, %v224
  %v243 = vld [vmem:[%s1] sm:$0xff]
  %v244 = vld [vmem:[%s1 + $0x8] sm:$0xff]
  %v245 = vld [vmem:[%s1 + $0x10] sm:$0xff]
  %v246 = vld [vmem:[%s1 + $0x18] sm:$0xff]
  %251 = vrot.lane.b32.xlu0 %v243, 96
  %v252 = vpop.permute.xlu0 %251
  %253 = vrot.lane.b32.xlu0 %v244, 96
  %v254 = vpop.permute.xlu0 %253
  %255 = vrot.lane.b32.xlu0 %v245, 96
  %v256 = vpop.permute.xlu0 %255
  %257 = vrot.lane.b32.xlu0 %v246, 96
  %v258 = vpop.permute.xlu0 %257
  %263 = vmatprep.subr.mxu0 0.0
  %264 = vmatpush1.msra.mxu0 %v252
  %265 = vmatprep.subr.mxu0 0.0
  %266 = vmatpush1.msra.mxu0 %v254
  %267 = vmatprep.subr.mxu0 0.0
  %268 = vmatpush1.msra.mxu0 %v256
  %269 = vmatprep.subr.mxu0 0.0
  %270 = vmatpush1.msra.mxu0 %v258
  %271 = vmatprep.subr.mxu0 0.0
  %272 = vmatpush1.msra.mxu0 0.0
  %273 = vmatprep.subr.mxu0 0.0
  %274 = vmatpush1.msra.mxu0 0.0
  %275 = vmatprep.subr.mxu0 0.0
  %276 = vmatpush1.msra.mxu0 0.0
  %277 = vmatprep.subr.mxu0 0.0
  %278 = vmatpush1.msra.mxu0 0.0
  %279 = vmatprep.subr.mxu0 0.0
  %280 = vmatpush1.msra.mxu0 0.0
  %281 = vmatprep.subr.mxu0 0.0
  %282 = vmatpush1.msra.mxu0 0.0
  %283 = vmatprep.subr.mxu0 0.0
  %284 = vmatpush1.msra.mxu0 0.0
  %285 = vmatprep.subr.mxu0 0.0
  %286 = vmatpush1.msra.mxu0 0.0
  %287 = vmatprep.subr.mxu0 0.0
  %288 = vmatpush1.msra.mxu0 0.0
  %289 = vmatprep.subr.mxu0 0.0
  %290 = vmatpush1.msra.mxu0 0.0
  %291 = vmatprep.subr.mxu0 0.0
  %292 = vmatpush1.msra.mxu0 0.0
  %293 = vmatprep.subr.mxu0 0.0
  %294 = vmatpush1.msra.mxu0 0.0
  %295 = vmatprep.subr.mxu0 0.0
  %296 = vmatpush1.msra.mxu0 0.0
  %297 = vmatprep.subr.mxu0 0.0
  %298 = vmatpush1.msra.mxu0 0.0
  %299 = vmatprep.subr.mxu0 0.0
  %300 = vmatpush1.msra.mxu0 0.0
  %301 = vmatprep.subr.mxu0 0.0
  %302 = vmatpush1.msra.mxu0 0.0
  %303 = vmatprep.subr.mxu0 0.0
  %304 = vmatpush1.msra.mxu0 0.0
  %305 = vmatprep.subr.mxu0 0.0
  %306 = vmatpush1.msra.mxu0 0.0
  %307 = vmatprep.subr.mxu0 0.0
  %308 = vmatpush1.msra.mxu0 0.0
  %309 = vmatprep.subr.mxu0 0.0
  %310 = vmatpush1.msra.mxu0 0.0
  %311 = vmatprep.subr.mxu0 0.0
  %312 = vmatpush1.msra.mxu0 0.0
  %313 = vmatprep.subr.mxu0 0.0
  %314 = vmatpush1.msra.mxu0 0.0
  %315 = vmatprep.subr.mxu0 0.0
  %316 = vmatpush1.msra.mxu0 0.0
  %317 = vmatprep.subr.mxu0 0.0
  %318 = vmatpush1.msra.mxu0 0.0
  %319 = vmatprep.subr.mxu0 0.0
  %320 = vmatpush1.msra.mxu0 0.0
  %321 = vmatprep.subr.mxu0 0.0
  %322 = vmatpush1.msra.mxu0 0.0
  %323 = vmatprep.subr.mxu0 0.0
  %324 = vmatpush1.msra.mxu0 0.0
  %325 = vmatprep.subr.mxu0 0.0
  %326 = vmatpush1.msra.mxu0 0.0
  %327 = vmatprep.mubr.f32.mxu0 0.0
  %328 = vmatmul.mubr.f32.gmra.mrb[0].mxu0 %v35
  %v329 = vpop.f32.mrb[0].mxu0
  %v330 = vadd.f32 0.0, %v329
  %v331 = vpop.f32.mrb[0].mxu0
  %332 = vmatprep.mubr.f32.mxu0 0.0
  %333 = vmatmul.mubr.f32.gmra.mrb[0].mxu0 %v38
  %v334 = vpop.f32.mrb[0].mxu0
  %v335 = vadd.f32 0.0, %v334
  %v336 = vpop.f32.mrb[0].mxu0
  %337 = vmatprep.mubr.f32.mxu0 0.0
  %338 = vmatmul.mubr.f32.gmra.mrb[0].mxu0 %v41
  %v339 = vpop.f32.mrb[0].mxu0
  %v340 = vadd.f32 0.0, %v339
  %v341 = vpop.f32.mrb[0].mxu0
  %342 = vmatprep.mubr.f32.mxu0 0.0
  %343 = vmatmul.mubr.f32.gmra.mrb[0].mxu0 %v44
  %v344 = vpop.f32.mrb[0].mxu0
  %v345 = vadd.f32 0.0, %v344
  %v346 = vpop.f32.mrb[0].mxu0
  %347 = vmatprep.mubr.f32.mxu0 0.0
  %348 = vmatmul.mubr.f32.gmra.mrb[0].mxu0 %v47
  %v349 = vpop.f32.mrb[0].mxu0
  %v350 = vadd.f32 0.0, %v349
  %v351 = vpop.f32.mrb[0].mxu0
  %352 = vmatprep.mubr.f32.mxu0 0.0
  %353 = vmatmul.mubr.f32.gmra.mrb[0].mxu0 %v50
  %v354 = vpop.f32.mrb[0].mxu0
  %v355 = vadd.f32 0.0, %v354
  %v356 = vpop.f32.mrb[0].mxu0
  %357 = vmatprep.mubr.f32.mxu0 0.0
  %358 = vmatmul.mubr.f32.gmra.mrb[0].mxu0 %v53
  %v359 = vpop.f32.mrb[0].mxu0
  %v360 = vadd.f32 0.0, %v359
  %v361 = vpop.f32.mrb[0].mxu0
  %362 = vmatprep.mubr.f32.mxu0 0.0
  %363 = vmatmul.mubr.f32.gmra.mrb[0].mxu0 %v56
  %v364 = vpop.f32.mrb[0].mxu0
  %v365 = vadd.f32 0.0, %v364
  %v366 = vpop.f32.mrb[0].mxu0
  %367 = vmatprep.mubr.f32.mxu0 0.0
  %368 = vmatmul.mubr.f32.gmra.mrb[0].mxu0 %v59
  %v369 = vpop.f32.mrb[0].mxu0
  %v370 = vadd.f32 0.0, %v369
  %v371 = vpop.f32.mrb[0].mxu0
  %372 = vmatprep.mubr.f32.mxu0 0.0
  %373 = vmatmul.mubr.f32.gmra.mrb[0].mxu0 %v62
  %v374 = vpop.f32.mrb[0].mxu0
  %v375 = vadd.f32 0.0, %v374
  %v376 = vpop.f32.mrb[0].mxu0
  %377 = vmatprep.mubr.f32.mxu0 0.0
  %378 = vmatmul.mubr.f32.gmra.mrb[0].mxu0 %v65
  %v379 = vpop.f32.mrb[0].mxu0
  %v380 = vadd.f32 0.0, %v379
  %v381 = vpop.f32.mrb[0].mxu0
  %382 = vmatprep.mubr.f32.mxu0 0.0
  %383 = vmatmul.mubr.f32.gmra.mrb[0].mxu0 %v68
  %v384 = vpop.f32.mrb[0].mxu0
  %v385 = vadd.f32 0.0, %v384
  %v386 = vpop.f32.mrb[0].mxu0
  %387 = vmatprep.mubr.f32.mxu0 0.0
  %388 = vmatmul.mubr.f32.gmra.mrb[0].mxu0 %v71
  %v389 = vpop.f32.mrb[0].mxu0
  %v390 = vadd.f32 0.0, %v389
  %v391 = vpop.f32.mrb[0].mxu0
  %392 = vmatprep.mubr.f32.mxu0 0.0
  %393 = vmatmul.mubr.f32.gmra.mrb[0].mxu0 %v74
  %v394 = vpop.f32.mrb[0].mxu0
  %v395 = vadd.f32 0.0, %v394
  %v396 = vpop.f32.mrb[0].mxu0
  %397 = vmatprep.mubr.f32.mxu0 0.0
  %398 = vmatmul.mubr.f32.gmra.mrb[0].mxu0 %v77
  %v399 = vpop.f32.mrb[0].mxu0
  %v400 = vadd.f32 0.0, %v399
  %v401 = vpop.f32.mrb[0].mxu0
  %402 = vmatprep.mubr.f32.mxu0 0.0
  %403 = vmatmul.mubr.f32.gmra.mrb[0].mxu0 %v80
  %v404 = vpop.f32.mrb[0].mxu0
  %v405 = vadd.f32 0.0, %v404
  %v406 = vpop.f32.mrb[0].mxu0
  %407 = vdwg.mxu0
  %408 = vst.msk [vmem:[%s3] sm:$0xff] %vm33, %v330
  %409 = vst.msk [vmem:[%s3 + $0x8] sm:$0xff] %vm33, %v335
  %410 = vst.msk [vmem:[%s3 + $0x10] sm:$0xff] %vm33, %v340
  %411 = vst.msk [vmem:[%s3 + $0x18] sm:$0xff] %vm33, %v345
  %412 = vst.msk [vmem:[%s3 + $0x20] sm:$0xff] %vm33, %v350
  %413 = vst.msk [vmem:[%s3 + $0x28] sm:$0xff] %vm33, %v355
  %414 = vst.msk [vmem:[%s3 + $0x30] sm:$0xff] %vm33, %v360
  %415 = vst.msk [vmem:[%s3 + $0x38] sm:$0xff] %vm33, %v365
  %416 = vst.msk [vmem:[%s3 + $0x40] sm:$0xff] %vm33, %v370
  %417 = vst.msk [vmem:[%s3 + $0x48] sm:$0xff] %vm33, %v375
  %418 = vst.msk [vmem:[%s3 + $0x50] sm:$0xff] %vm33, %v380
  %419 = vst.msk [vmem:[%s3 + $0x58] sm:$0xff] %vm33, %v385
  %420 = vst.msk [vmem:[%s3 + $0x60] sm:$0xff] %vm33, %v390
  %421 = vst.msk [vmem:[%s3 + $0x68] sm:$0xff] %vm33, %v395
  %422 = vst.msk [vmem:[%s3 + $0x70] sm:$0xff] %vm33, %v400
  %423 = vst.msk [vmem:[%s3 + $0x78] sm:$0xff] %vm33, %v405
  // Predicated region
  $region10: #{tpu_custom_call.1} parent=0 // pred_check
    _
  $region11: #{tpu_custom_call.1} parent=0 // pred_check_branch
    %425 = sbr.rel (0) target = $region13
  $region12: #{tpu_custom_call.1} parent=0 // pred_region
    _
  $region13: #{tpu_custom_call.1} parent=0 // pred_fallthru
    _
  // Predicated region
  $region14: #{tpu_custom_call.1} parent=0 // pred_check
    _
  $region15: #{tpu_custom_call.1} parent=0 // pred_check_branch
    %427 = sbr.rel (0) target = $region17
  $region16: #{tpu_custom_call.1} parent=0 // pred_region
    _
  $region17: #{tpu_custom_call.1} parent=0 // pred_fallthru
    _
  // Predicated region
  $region18: #{tpu_custom_call.1} parent=0 // pred_check
    _
  $region19: #{tpu_custom_call.1} parent=0 // pred_check_branch
    %429 = sbr.rel (0) target = $region21
  $region20: #{tpu_custom_call.1} parent=0 // pred_region
    _
  $region21: #{tpu_custom_call.1} parent=0 // pred_fallthru
    _
  // Predicated region
  $region22: #{tpu_custom_call.1} parent=0 // pred_check
    _
  $region23: #{tpu_custom_call.1} parent=0 // pred_check_branch
    %431 = sbr.rel (0) target = $region25
  $region24: #{tpu_custom_call.1} parent=0 // pred_region
    _
  $region25: #{tpu_custom_call.1} parent=0 // pred_fallthru
    _

</llo_original>
